<compile_context>
chip_gen: v5e
topology: v5e:2x2
jax: 0.10.0
libtpu: 0.0.40
codegen_flags: <defaults>
</compile_context>

<pallas_src>
import functools

import jax
import jax.numpy as jnp
from jax.experimental import pallas as pl
from jax.experimental.pallas import tpu as pltpu

_NEG_INF = -1e30  # large finite negative: avoids exp(-inf - m) edge cases


def _flash_attn_kernel(xq_ref, xkv_ref, wq_ref, wk_ref, wv_ref, wo_ref, o_ref,
                       q_sc, m_sc, l_sc, pv_sc, out_sc, *, tq, tkv):
    """Grid = (B, n_q_tiles, H, n_kv_tiles); H and kv are reduction axes.

    xq_ref : (1, tq,  K)  query-side tokens for this q tile
    xkv_ref: (1, tkv, K)  key/value-side tokens for this kv tile
    wq_ref : (1, K, K)    per-head query projection (K**-0.5 pre-folded)
    wk_ref : (1, K, K)    per-head key projection
    wv_ref : (1, K, K)    per-head value projection
    wo_ref : (1, K, K)    per-head slice of the head-unifier weight
    o_ref  : (1, tq, K)   output tile
    q_sc   : (tq, K)      projected queries for the current head (input dtype)
    m_sc   : (tq, 1) f32  running row max
    l_sc   : (tq, 1) f32  running (unnormalized) row sum
    pv_sc  : (tq, K) f32  running unnormalized P @ V
    out_sc : (tq, K) f32  output accumulator across heads
    """
    qi = pl.program_id(1)
    h = pl.program_id(2)
    ki = pl.program_id(3)
    n_h = pl.num_programs(2)
    n_kv = pl.num_programs(3)

    # Zero the cross-head output accumulator at the first reduction step.
    @pl.when(jnp.logical_and(h == 0, ki == 0))
    def _():
        out_sc[...] = jnp.zeros_like(out_sc)

    # Per-head init: project queries once per (q-tile, head); reset stats.
    @pl.when(ki == 0)
    def _():
        q = jnp.dot(xq_ref[0], wq_ref[0], preferred_element_type=jnp.float32)
        q_sc[...] = q.astype(q_sc.dtype)
        m_sc[...] = jnp.full_like(m_sc, _NEG_INF)
        l_sc[...] = jnp.zeros_like(l_sc)
        pv_sc[...] = jnp.zeros_like(pv_sc)

    # Skip kv tiles that lie entirely in the causal future of this q tile.
    @pl.when(ki * tkv <= qi * tq + (tq - 1))
    def _():
        x_kv = xkv_ref[0]
        k_blk = jnp.dot(x_kv, wk_ref[0],
                        preferred_element_type=jnp.float32).astype(x_kv.dtype)
        v_blk = jnp.dot(x_kv, wv_ref[0],
                        preferred_element_type=jnp.float32).astype(x_kv.dtype)

        # logits for this (q tile, kv tile): (tq, tkv)
        s = jax.lax.dot_general(
            q_sc[...], k_blk,
            dimension_numbers=(((1,), (1,)), ((), ())),
            preferred_element_type=jnp.float32)

        row = qi * tq + jax.lax.broadcasted_iota(jnp.int32, (tq, tkv), 0)
        col = ki * tkv + jax.lax.broadcasted_iota(jnp.int32, (tq, tkv), 1)
        s = jnp.where(col <= row, s, _NEG_INF)

        m_prev = m_sc[...]
        m_new = jnp.maximum(m_prev, jnp.max(s, axis=-1, keepdims=True))
        alpha = jnp.exp(m_prev - m_new)
        p = jnp.exp(s - m_new)                    # unnormalized probabilities
        l_sc[...] = alpha * l_sc[...] + jnp.sum(p, axis=-1, keepdims=True)
        pv_sc[...] = alpha * pv_sc[...] + jnp.dot(
            p.astype(v_blk.dtype), v_blk, preferred_element_type=jnp.float32)
        m_sc[...] = m_new

    # Finalize this head: deferred normalization (one (tq, K) multiply instead
    # of a (tq, tkv) divide per kv step), then fold through the per-head slice
    # of the unifier weight into the output accumulator.
    @pl.when(ki == n_kv - 1)
    def _():
        # approx=True moves the reciprocal onto the EUP slot; kept exact here
        # to preserve f32 parity with the reference at negligible cost.
        head_out = pv_sc[...] * pl.reciprocal(l_sc[...], approx=False)
        out_sc[...] += jnp.dot(head_out.astype(wo_ref.dtype), wo_ref[0],
                               preferred_element_type=jnp.float32)

    # Single wide writeback of the finished tile at the last reduction step.
    @pl.when(jnp.logical_and(h == n_h - 1, ki == n_kv - 1))
    def _():
        o_ref[0] = out_sc[...].astype(o_ref.dtype)


def _largest_tile(s, cap=128):
    for t in (cap, 64, 32, 16, 8):
        if t <= s and s % t == 0:
            return t
    return s


def self_attention(x, w_keys, w_queries, w_values, w_unify, num_heads,
                   *, q_tile=None, kv_tile=None):
    """x: (B, S, K). Weights in PyTorch nn.Linear layout (out, in)."""
    B, S, K = x.shape
    H = num_heads

    # ---- wrapper-side weight prep (pure layout glue, done once) -----------
    # per-head (K_in, K_out) slices, head axis leading so BlockSpec blocks are
    # full (K, K) tiles (no lane-dim slicing, no in-kernel transposes).
    scale = 1.0 / (float(K) ** 0.5)          # = (K**-0.25) applied to q AND k
    wq_h = jnp.transpose(jnp.asarray(w_queries).reshape(H, K, K), (0, 2, 1)) * scale
    wk_h = jnp.transpose(jnp.asarray(w_keys).reshape(H, K, K), (0, 2, 1))
    wv_h = jnp.transpose(jnp.asarray(w_values).reshape(H, K, K), (0, 2, 1))
    wo_h = jnp.transpose(jnp.asarray(w_unify).reshape(K, H, K), (1, 2, 0))

    tq = q_tile or _largest_tile(S)
    tkv = kv_tile or _largest_tile(S)
    assert S % tq == 0 and S % tkv == 0, "sequence must be divisible by tiles"
    n_q = S // tq
    n_kv = S // tkv

    kernel = functools.partial(_flash_attn_kernel, tq=tq, tkv=tkv)

    # ---- VMEM budget (re-derived for v7x's smaller VMEM, with headroom) ---
    itemsize = jnp.dtype(x.dtype).itemsize
    block_bytes = 2 * ((tq * K) + (tkv * K) + 4 * (K * K) + (tq * K)) * itemsize
    scratch_bytes = (tq * K) * itemsize + (2 * tq + 2 * tq * K) * 4
    vmem_limit = int(min(48 * 1024 * 1024,
                         max(16 * 1024 * 1024, 4 * (block_bytes + scratch_bytes))))

    # ---- advisory cost estimate for the XLA scheduler ----------------------
    flops = (2 * B * S * K * (H * K) * 3        # QKV projections
             + 2 * B * H * S * S * K * 2        # Q @ K^T and P @ V
             + 2 * B * S * (H * K) * K)         # head unification
    transcendentals = B * H * S * S             # softmax exps
    bytes_accessed = itemsize * (2 * B * S * K + 4 * H * K * K + B * S * K)
    cost = pl.CostEstimate(flops=flops, transcendentals=transcendentals,
                           bytes_accessed=bytes_accessed)

    return pl.pallas_call(
        kernel,
        out_shape=jax.ShapeDtypeStruct((B, S, K), x.dtype),
        grid_spec=pltpu.PrefetchScalarGridSpec(
            num_scalar_prefetch=0,
            grid=(B, n_q, H, n_kv),
            in_specs=[
                pl.BlockSpec((1, tq, K), lambda b, qi, h, ki: (b, qi, 0)),   # x (queries)
                pl.BlockSpec((1, tkv, K), lambda b, qi, h, ki: (b, ki, 0)),  # x (keys/values)
                pl.BlockSpec((1, K, K), lambda b, qi, h, ki: (h, 0, 0)),     # wq (scaled)
                pl.BlockSpec((1, K, K), lambda b, qi, h, ki: (h, 0, 0)),     # wk
                pl.BlockSpec((1, K, K), lambda b, qi, h, ki: (h, 0, 0)),     # wv
                pl.BlockSpec((1, K, K), lambda b, qi, h, ki: (h, 0, 0)),     # wo
            ],
            out_specs=pl.BlockSpec((1, tq, K), lambda b, qi, h, ki: (b, qi, 0)),
            scratch_shapes=[
                pltpu.VMEM((tq, K), x.dtype),       # projected q tile
                pltpu.VMEM((tq, 1), jnp.float32),   # running max
                pltpu.VMEM((tq, 1), jnp.float32),   # running sum
                pltpu.VMEM((tq, K), jnp.float32),   # unnormalized P @ V
                pltpu.VMEM((tq, K), jnp.float32),   # cross-head output acc
            ],
        ),
        compiler_params=pltpu.CompilerParams(
            dimension_semantics=("parallel", "parallel", "arbitrary", "arbitrary"),
            vmem_limit_bytes=vmem_limit,
        ),
        cost_estimate=cost,
    )(x, x, wq_h, wk_h, wv_h, wo_h)


def _reference(x, w_keys, w_queries, w_values, w_unify, num_heads):
    """Pure-JAX mirror of the PyTorch forward, for validation."""
    B, S, K = x.shape
    h = num_heads
    keys = (x @ w_keys.T).reshape(B, S, h, K)
    queries = (x @ w_queries.T).reshape(B, S, h, K)
    values = (x @ w_values.T).reshape(B, S, h, K)
    keys = jnp.transpose(keys, (0, 2, 1, 3)).reshape(B * h, S, K)
    queries = jnp.transpose(queries, (0, 2, 1, 3)).reshape(B * h, S, K)
    values = jnp.transpose(values, (0, 2, 1, 3)).reshape(B * h, S, K)
    scale = K ** 0.25
    queries = queries / scale
    keys = keys / scale
    dot = jnp.einsum('bqd,bkd->bqk', queries, keys)
    mask = jnp.tril(jnp.ones((S, S), dtype=bool))
    dot = jnp.where(mask[None], dot, -jnp.inf)
    weights = jax.nn.softmax(dot, axis=2)
    heads_out = jnp.einsum('bqk,bkd->bqd', weights, values).reshape(B, h, S, K)
    heads_out = jnp.transpose(heads_out, (0, 2, 1, 3)).reshape(B, S, h * K)
    return heads_out @ w_unify.T


if __name__ == "__main__":
    batch, seq, k, num_heads = 2, 8, 32, 4

    key = jax.random.PRNGKey(0)
    kx, kk, kq, kv, ko = jax.random.split(key, 5)

    x = jax.random.normal(kx, (batch, seq, k), dtype=jnp.float32)

    # nn.Linear weight layout: (out_features, in_features); deterministic init.
    bound = 1.0 / (k ** 0.5)
    w_keys = jax.random.uniform(kk, (num_heads * k, k), jnp.float32, -bound, bound)
    w_queries = jax.random.uniform(kq, (num_heads * k, k), jnp.float32, -bound, bound)
    w_values = jax.random.uniform(kv, (num_heads * k, k), jnp.float32, -bound, bound)
    bound_u = 1.0 / ((num_heads * k) ** 0.5)
    w_unify = jax.random.uniform(ko, (k, num_heads * k), jnp.float32, -bound_u, bound_u)

    out = self_attention(x, w_keys, w_queries, w_values, w_unify, num_heads)
    out = jax.block_until_ready(out)

    ref = _reference(x, w_keys, w_queries, w_values, w_unify, num_heads)
    assert out.shape == (batch, seq, k)
    assert jnp.allclose(out, ref, atol=5e-4, rtol=5e-4), "mismatch vs reference"

    print("KERNEL_OK")
</pallas_src>

<mosaic_0001>
module attributes {stable_mosaic.version = 11 : i64} {
  func.func @_flash_attn_kernel(%arg0: i32, %arg1: i32, %arg2: i32, %arg3: i32, %arg4: memref<1x8x32xf32, #tpu.memory_space<vmem>>, %arg5: memref<1x8x32xf32, #tpu.memory_space<vmem>>, %arg6: memref<1x32x32xf32, #tpu.memory_space<vmem>>, %arg7: memref<1x32x32xf32, #tpu.memory_space<vmem>>, %arg8: memref<1x32x32xf32, #tpu.memory_space<vmem>>, %arg9: memref<1x32x32xf32, #tpu.memory_space<vmem>>, %arg10: memref<1x8x32xf32, #tpu.memory_space<vmem>>, %arg11: memref<8x32xf32, #tpu.memory_space<vmem>>, %arg12: memref<8x1xf32, #tpu.memory_space<vmem>>, %arg13: memref<8x1xf32, #tpu.memory_space<vmem>>, %arg14: memref<8x32xf32, #tpu.memory_space<vmem>>, %arg15: memref<8x32xf32, #tpu.memory_space<vmem>>) attributes {dimension_semantics = [#tpu.dimension_semantics<parallel>, #tpu.dimension_semantics<parallel>, #tpu.dimension_semantics<arbitrary>, #tpu.dimension_semantics<arbitrary>], iteration_bounds = array<i64: 2, 1, 4, 1>, scalar_prefetch = 0 : i64, scratch_operands = 5 : i64, tpu.core_type = #tpu.core_type<tc>, window_params = [{transform_indices = @transform_0, window_bounds = array<i64: 1, 8, 32>}, {transform_indices = @transform_1, window_bounds = array<i64: 1, 8, 32>}, {transform_indices = @transform_2, window_bounds = array<i64: 1, 32, 32>}, {transform_indices = @transform_3, window_bounds = array<i64: 1, 32, 32>}, {transform_indices = @transform_4, window_bounds = array<i64: 1, 32, 32>}, {transform_indices = @transform_5, window_bounds = array<i64: 1, 32, 32>}, {transform_indices = @transform_6, window_bounds = array<i64: 1, 8, 32>}]} {
    %c0_i32 = arith.constant 0 : i32
    %0 = arith.cmpi eq, %arg2, %c0_i32 : i32
    %c0_i32_0 = arith.constant 0 : i32
    %1 = arith.cmpi eq, %arg3, %c0_i32_0 : i32
    %2 = arith.andi %0, %1 : i1
    %3 = arith.extui %2 : i1 to i32
    %c0_i32_1 = arith.constant 0 : i32
    %4 = arith.cmpi ne, %3, %c0_i32_1 : i32
    scf.if %4 {
      %cst = arith.constant 0.000000e+00 : f32
      %22 = vector.broadcast %cst : f32 to vector<8x32xf32>
      %c0 = arith.constant 0 : index
      %c0_10 = arith.constant 0 : index
      %23 = vector.load %arg15[%c0, %c0_10] : memref<8x32xf32, #tpu.memory_space<vmem>>, vector<8x32xf32>
      tpu.vector_store %arg15[%c0, %c0_10], %22 {strides = array<i32>} : memref<8x32xf32, #tpu.memory_space<vmem>>, vector<8x32xf32>,
    } else {
    }
    %c0_i32_2 = arith.constant 0 : i32
    %5 = arith.cmpi eq, %arg3, %c0_i32_2 : i32
    %6 = arith.extui %5 : i1 to i32
    %c0_i32_3 = arith.constant 0 : i32
    %7 = arith.cmpi ne, %6, %c0_i32_3 : i32
    scf.if %7 {
      %c0 = arith.constant 0 : index
      %c0_10 = arith.constant 0 : index
      %c0_11 = arith.constant 0 : index
      %22 = vector.load %arg4[%c0, %c0_10, %c0_11] : memref<1x8x32xf32, #tpu.memory_space<vmem>>, vector<1x8x32xf32>
      %23 = vector.shape_cast %22 : vector<1x8x32xf32> to vector<8x32xf32>
      %c0_12 = arith.constant 0 : index
      %c0_13 = arith.constant 0 : index
      %c0_14 = arith.constant 0 : index
      %24 = vector.load %arg6[%c0_12, %c0_13, %c0_14] : memref<1x32x32xf32, #tpu.memory_space<vmem>>, vector<1x32x32xf32>
      %25 = vector.shape_cast %24 : vector<1x32x32xf32> to vector<32x32xf32>
      %cst = arith.constant dense<0.000000e+00> : vector<8x32xf32>
      %26 = tpu.matmul %23, %25, %cst {dimension_numbers = #tpu.dot_dimension_numbers<[1], [0], [0], [1], [0, 0, 1, 1], [], []>} : vector<8x32xf32>, vector<32x32xf32>, vector<8x32xf32> -> vector<8x32xf32>
      %c0_15 = arith.constant 0 : index
      %c0_16 = arith.constant 0 : index
      %27 = vector.load %arg11[%c0_15, %c0_16] : memref<8x32xf32, #tpu.memory_space<vmem>>, vector<8x32xf32>
      tpu.vector_store %arg11[%c0_15, %c0_16], %26 {strides = array<i32>} : memref<8x32xf32, #tpu.memory_space<vmem>>, vector<8x32xf32>,
      %cst_17 = arith.constant -1.000000e+30 : f32
      %28 = vector.broadcast %cst_17 : f32 to vector<8x1xf32>
      %c0_18 = arith.constant 0 : index
      %c0_19 = arith.constant 0 : index
      %29 = vector.load %arg12[%c0_18, %c0_19] : memref<8x1xf32, #tpu.memory_space<vmem>>, vector<8x1xf32>
      tpu.vector_store %arg12[%c0_18, %c0_19], %28 {strides = array<i32>} : memref<8x1xf32, #tpu.memory_space<vmem>>, vector<8x1xf32>,
      %cst_20 = arith.constant 0.000000e+00 : f32
      %30 = vector.broadcast %cst_20 : f32 to vector<8x1xf32>
      %c0_21 = arith.constant 0 : index
      %c0_22 = arith.constant 0 : index
      %31 = vector.load %arg13[%c0_21, %c0_22] : memref<8x1xf32, #tpu.memory_space<vmem>>, vector<8x1xf32>
      tpu.vector_store %arg13[%c0_21, %c0_22], %30 {strides = array<i32>} : memref<8x1xf32, #tpu.memory_space<vmem>>, vector<8x1xf32>,
      %cst_23 = arith.constant 0.000000e+00 : f32
      %32 = vector.broadcast %cst_23 : f32 to vector<8x32xf32>
      %c0_24 = arith.constant 0 : index
      %c0_25 = arith.constant 0 : index
      %33 = vector.load %arg14[%c0_24, %c0_25] : memref<8x32xf32, #tpu.memory_space<vmem>>, vector<8x32xf32>
      tpu.vector_store %arg14[%c0_24, %c0_25], %32 {strides = array<i32>} : memref<8x32xf32, #tpu.memory_space<vmem>>, vector<8x32xf32>,
    } else {
    }
    %c8_i32 = arith.constant 8 : i32
    %8 = arith.muli %arg3, %c8_i32 : i32
    %c8_i32_4 = arith.constant 8 : i32
    %9 = arith.muli %arg1, %c8_i32_4 : i32
    %c7_i32 = arith.constant 7 : i32
    %10 = arith.addi %9, %c7_i32 : i32
    %11 = arith.cmpi sle, %8, %10 : i32
    %12 = arith.extui %11 : i1 to i32
    %c0_i32_5 = arith.constant 0 : i32
    %13 = arith.cmpi ne, %12, %c0_i32_5 : i32
    scf.if %13 {
      %c0 = arith.constant 0 : index
      %c0_10 = arith.constant 0 : index
      %c0_11 = arith.constant 0 : index
      %22 = vector.load %arg5[%c0, %c0_10, %c0_11] : memref<1x8x32xf32, #tpu.memory_space<vmem>>, vector<1x8x32xf32>
      %23 = vector.shape_cast %22 : vector<1x8x32xf32> to vector<8x32xf32>
      %c0_12 = arith.constant 0 : index
      %c0_13 = arith.constant 0 : index
      %c0_14 = arith.constant 0 : index
      %24 = vector.load %arg7[%c0_12, %c0_13, %c0_14] : memref<1x32x32xf32, #tpu.memory_space<vmem>>, vector<1x32x32xf32>
      %25 = vector.shape_cast %24 : vector<1x32x32xf32> to vector<32x32xf32>
      %cst = arith.constant dense<0.000000e+00> : vector<8x32xf32>
      %26 = tpu.matmul %23, %25, %cst {dimension_numbers = #tpu.dot_dimension_numbers<[1], [0], [0], [1], [0, 0, 1, 1], [], []>} : vector<8x32xf32>, vector<32x32xf32>, vector<8x32xf32> -> vector<8x32xf32>
      %c0_15 = arith.constant 0 : index
      %c0_16 = arith.constant 0 : index
      %c0_17 = arith.constant 0 : index
      %27 = vector.load %arg8[%c0_15, %c0_16, %c0_17] : memref<1x32x32xf32, #tpu.memory_space<vmem>>, vector<1x32x32xf32>
      %28 = vector.shape_cast %27 : vector<1x32x32xf32> to vector<32x32xf32>
      %cst_18 = arith.constant dense<0.000000e+00> : vector<8x32xf32>
      %29 = tpu.matmul %23, %28, %cst_18 {dimension_numbers = #tpu.dot_dimension_numbers<[1], [0], [0], [1], [0, 0, 1, 1], [], []>} : vector<8x32xf32>, vector<32x32xf32>, vector<8x32xf32> -> vector<8x32xf32>
      %c0_19 = arith.constant 0 : index
      %c0_20 = arith.constant 0 : index
      %30 = vector.load %arg11[%c0_19, %c0_20] : memref<8x32xf32, #tpu.memory_space<vmem>>, vector<8x32xf32>
      %cst_21 = arith.constant dense<0.000000e+00> : vector<8x8xf32>
      %31 = tpu.matmul %30, %26, %cst_21 {dimension_numbers = #tpu.dot_dimension_numbers<[1], [1], [0], [0], [0, 0, 1, 0], [], []>} : vector<8x32xf32>, vector<8x32xf32>, vector<8x8xf32> -> vector<8x8xf32>
      %c8_i32_22 = arith.constant 8 : i32
      %32 = arith.muli %arg1, %c8_i32_22 : i32
      %33 = tpu.iota {dimensions = array<i32: 0>} : vector<8x8xi32>
      %34 = vector.broadcast %32 : i32 to vector<8x8xi32>
      %35 = arith.addi %34, %33 : vector<8x8xi32>
      %c8_i32_23 = arith.constant 8 : i32
      %36 = arith.muli %arg3, %c8_i32_23 : i32
      %37 = tpu.iota {dimensions = array<i32: 1>} : vector<8x8xi32>
      %38 = vector.broadcast %36 : i32 to vector<8x8xi32>
      %39 = arith.addi %38, %37 : vector<8x8xi32>
      %40 = arith.cmpi sle, %39, %35 : vector<8x8xi32>
      %cst_24 = arith.constant -1.000000e+30 : f32
      %41 = vector.broadcast %cst_24 : f32 to vector<8x8xf32>
      %42 = arith.select %40, %31, %41 : vector<8x8xi1>, vector<8x8xf32>
      %c0_25 = arith.constant 0 : index
      %c0_26 = arith.constant 0 : index
      %43 = vector.load %arg12[%c0_25, %c0_26] : memref<8x1xf32, #tpu.memory_space<vmem>>, vector<8x1xf32>
      %cst_27 = arith.constant dense<0xFF800000> : vector<8xf32>
      %44 = vector.multi_reduction <maximumf>, %42, %cst_27 [1] : vector<8x8xf32> to vector<8xf32>
      %45 = vector.shape_cast %44 : vector<8xf32> to vector<8x1xf32>
      %46 = arith.maximumf %43, %45 : vector<8x1xf32>
      %47 = arith.subf %43, %46 : vector<8x1xf32>
      %48 = math.exp %47 : vector<8x1xf32>
      %49 = vector.broadcast %46 : vector<8x1xf32> to vector<8x8xf32>
      %50 = arith.subf %42, %49 : vector<8x8xf32>
      %51 = math.exp %50 : vector<8x8xf32>
      %c0_28 = arith.constant 0 : index
      %c0_29 = arith.constant 0 : index
      %52 = vector.load %arg13[%c0_28, %c0_29] : memref<8x1xf32, #tpu.memory_space<vmem>>, vector<8x1xf32>
      %53 = arith.mulf %48, %52 : vector<8x1xf32>
      %cst_30 = arith.constant dense<0.000000e+00> : vector<8xf32>
      %54 = vector.multi_reduction <add>, %51, %cst_30 [1] : vector<8x8xf32> to vector<8xf32>
      %55 = vector.shape_cast %54 : vector<8xf32> to vector<8x1xf32>
      %56 = arith.addf %53, %55 : vector<8x1xf32>
      %c0_31 = arith.constant 0 : index
      %c0_32 = arith.constant 0 : index
      %57 = vector.load %arg13[%c0_31, %c0_32] : memref<8x1xf32, #tpu.memory_space<vmem>>, vector<8x1xf32>
      tpu.vector_store %arg13[%c0_31, %c0_32], %56 {strides = array<i32>} : memref<8x1xf32, #tpu.memory_space<vmem>>, vector<8x1xf32>,
      %c0_33 = arith.constant 0 : index
      %c0_34 = arith.constant 0 : index
      %58 = vector.load %arg14[%c0_33, %c0_34] : memref<8x32xf32, #tpu.memory_space<vmem>>, vector<8x32xf32>
      %59 = vector.broadcast %48 : vector<8x1xf32> to vector<8x32xf32>
      %60 = arith.mulf %59, %58 : vector<8x32xf32>
      %cst_35 = arith.constant dense<0.000000e+00> : vector<8x32xf32>
      %61 = tpu.matmul %51, %29, %cst_35 {dimension_numbers = #tpu.dot_dimension_numbers<[1], [0], [0], [1], [0, 0, 1, 1], [], []>} : vector<8x8xf32>, vector<8x32xf32>, vector<8x32xf32> -> vector<8x32xf32>
      %62 = arith.addf %60, %61 : vector<8x32xf32>
      %c0_36 = arith.constant 0 : index
      %c0_37 = arith.constant 0 : index
      %63 = vector.load %arg14[%c0_36, %c0_37] : memref<8x32xf32, #tpu.memory_space<vmem>>, vector<8x32xf32>
      tpu.vector_store %arg14[%c0_36, %c0_37], %62 {strides = array<i32>} : memref<8x32xf32, #tpu.memory_space<vmem>>, vector<8x32xf32>,
      %c0_38 = arith.constant 0 : index
      %c0_39 = arith.constant 0 : index
      %64 = vector.load %arg12[%c0_38, %c0_39] : memref<8x1xf32, #tpu.memory_space<vmem>>, vector<8x1xf32>
      tpu.vector_store %arg12[%c0_38, %c0_39], %46 {strides = array<i32>} : memref<8x1xf32, #tpu.memory_space<vmem>>, vector<8x1xf32>,
    } else {
    }
    %c0_i32_6 = arith.constant 0 : i32
    %14 = arith.cmpi eq, %arg3, %c0_i32_6 : i32
    %15 = arith.extui %14 : i1 to i32
    %c0_i32_7 = arith.constant 0 : i32
    %16 = arith.cmpi ne, %15, %c0_i32_7 : i32
    scf.if %16 {
      %c0 = arith.constant 0 : index
      %c0_10 = arith.constant 0 : index
      %22 = vector.load %arg14[%c0, %c0_10] : memref<8x32xf32, #tpu.memory_space<vmem>>, vector<8x32xf32>
      %c0_11 = arith.constant 0 : index
      %c0_12 = arith.constant 0 : index
      %23 = vector.load %arg13[%c0_11, %c0_12] : memref<8x1xf32, #tpu.memory_space<vmem>>, vector<8x1xf32>
      %24 = tpu.reciprocal %23 : vector<8x1xf32> -> vector<8x1xf32>
      %25 = vector.broadcast %24 : vector<8x1xf32> to vector<8x32xf32>
      %26 = arith.mulf %22, %25 : vector<8x32xf32>
      %c0_13 = arith.constant 0 : index
      %c0_14 = arith.constant 0 : index
      %27 = vector.load %arg15[%c0_13, %c0_14] : memref<8x32xf32, #tpu.memory_space<vmem>>, vector<8x32xf32>
      %c0_15 = arith.constant 0 : index
      %c0_16 = arith.constant 0 : index
      %c0_17 = arith.constant 0 : index
      %28 = vector.load %arg9[%c0_15, %c0_16, %c0_17] : memref<1x32x32xf32, #tpu.memory_space<vmem>>, vector<1x32x32xf32>
      %29 = vector.shape_cast %28 : vector<1x32x32xf32> to vector<32x32xf32>
      %cst = arith.constant dense<0.000000e+00> : vector<8x32xf32>
      %30 = tpu.matmul %26, %29, %cst {dimension_numbers = #tpu.dot_dimension_numbers<[1], [0], [0], [1], [0, 0, 1, 1], [], []>} : vector<8x32xf32>, vector<32x32xf32>, vector<8x32xf32> -> vector<8x32xf32>
      %31 = arith.addf %27, %30 : vector<8x32xf32>
      %c0_18 = arith.constant 0 : index
      %c0_19 = arith.constant 0 : index
      %32 = vector.load %arg15[%c0_18, %c0_19] : memref<8x32xf32, #tpu.memory_space<vmem>>, vector<8x32xf32>
      tpu.vector_store %arg15[%c0_18, %c0_19], %31 {strides = array<i32>} : memref<8x32xf32, #tpu.memory_space<vmem>>, vector<8x32xf32>,
    } else {
    }
    %c3_i32 = arith.constant 3 : i32
    %17 = arith.cmpi eq, %arg2, %c3_i32 : i32
    %c0_i32_8 = arith.constant 0 : i32
    %18 = arith.cmpi eq, %arg3, %c0_i32_8 : i32
    %19 = arith.andi %17, %18 : i1
    %20 = arith.extui %19 : i1 to i32
    %c0_i32_9 = arith.constant 0 : i32
    %21 = arith.cmpi ne, %20, %c0_i32_9 : i32
    scf.if %21 {
      %c0 = arith.constant 0 : index
      %c0_10 = arith.constant 0 : index
      %22 = vector.load %arg15[%c0, %c0_10] : memref<8x32xf32, #tpu.memory_space<vmem>>, vector<8x32xf32>
      %c0_11 = arith.constant 0 : index
      %c0_12 = arith.constant 0 : index
      %c0_13 = arith.constant 0 : index
      %23 = vector.load %arg10[%c0_11, %c0_12, %c0_13] : memref<1x8x32xf32, #tpu.memory_space<vmem>>, vector<1x8x32xf32>
      %24 = vector.shape_cast %23 : vector<1x8x32xf32> to vector<8x32xf32>
      %25 = vector.shape_cast %22 : vector<8x32xf32> to vector<1x8x32xf32>
      tpu.vector_store %arg10[%c0_11, %c0_12, %c0_13], %25 {strides = array<i32>} : memref<1x8x32xf32, #tpu.memory_space<vmem>>, vector<1x8x32xf32>,
    } else {
    }
    return
  }
  func.func @transform_0(%arg0: i32, %arg1: i32, %arg2: i32, %arg3: i32) -> (i32, i32, i32) {
    %c0_i32 = arith.constant 0 : i32
    %c0_i32_0 = arith.constant 0 : i32
    return %arg0, %arg1, %c0_i32 : i32, i32, i32
  }
  func.func @transform_1(%arg0: i32, %arg1: i32, %arg2: i32, %arg3: i32) -> (i32, i32, i32) {
    %c0_i32 = arith.constant 0 : i32
    %c0_i32_0 = arith.constant 0 : i32
    return %arg0, %arg3, %c0_i32 : i32, i32, i32
  }
  func.func @transform_2(%arg0: i32, %arg1: i32, %arg2: i32, %arg3: i32) -> (i32, i32, i32) {
    %c0_i32 = arith.constant 0 : i32
    %c0_i32_0 = arith.constant 0 : i32
    %c0_i32_1 = arith.constant 0 : i32
    return %arg2, %c0_i32, %c0_i32_0 : i32, i32, i32
  }
  func.func @transform_3(%arg0: i32, %arg1: i32, %arg2: i32, %arg3: i32) -> (i32, i32, i32) {
    %c0_i32 = arith.constant 0 : i32
    %c0_i32_0 = arith.constant 0 : i32
    %c0_i32_1 = arith.constant 0 : i32
    return %arg2, %c0_i32, %c0_i32_0 : i32, i32, i32
  }
  func.func @transform_4(%arg0: i32, %arg1: i32, %arg2: i32, %arg3: i32) -> (i32, i32, i32) {
    %c0_i32 = arith.constant 0 : i32
    %c0_i32_0 = arith.constant 0 : i32
    %c0_i32_1 = arith.constant 0 : i32
    return %arg2, %c0_i32, %c0_i32_0 : i32, i32, i32
  }
  func.func @transform_5(%arg0: i32, %arg1: i32, %arg2: i32, %arg3: i32) -> (i32, i32, i32) {
    %c0_i32 = arith.constant 0 : i32
    %c0_i32_0 = arith.constant 0 : i32
    %c0_i32_1 = arith.constant 0 : i32
    return %arg2, %c0_i32, %c0_i32_0 : i32, i32, i32
  }
  func.func @transform_6(%arg0: i32, %arg1: i32, %arg2: i32, %arg3: i32) -> (i32, i32, i32) {
    %c0_i32 = arith.constant 0 : i32
    %c0_i32_0 = arith.constant 0 : i32
    return %arg0, %arg1, %c0_i32 : i32, i32, i32
  }
}

</mosaic_0001>

<llo_original>
// kernel: tpu_custom_call.1
$region0: #{tpu_custom_call.1}
  #allocation0 [shape = 'u32[]', space=smem, size = 0x4, offset = 0x4, fixed_abs, tag = 'smem constant byte address 0x4 - core index']
  #allocation1 [shape = 'u32[72,128]{1,0:T(1,128)}', space=vmem, size = 0x9000, scoped, tag = 'internal scratch']
  #allocation2 [shape = 'f32[8,32]{1,0:T(8,128)}', space=vmem, size = 0x1000, scoped, tag = 'scratch operand']
  #allocation3 [shape = 'f32[8,1]{1,0:T(8,128)}', space=vmem, size = 0x1000, scoped, tag = 'scratch operand']
  #allocation4 [shape = 'f32[8,1]{1,0:T(8,128)}', space=vmem, size = 0x1000, scoped, tag = 'scratch operand']
  #allocation5 [shape = 'f32[8,32]{1,0:T(8,128)}', space=vmem, size = 0x1000, scoped, tag = 'scratch operand']
  #allocation6 [shape = 'f32[8,32]{1,0:T(8,128)}', space=vmem, size = 0x1000, scoped, tag = 'scratch operand']
  %s0 = inlined_call_operand.hbm [shape: f32[2,8,32], index: 0, kind: input, shape index: {}]
  %s1 = inlined_call_operand.hbm [shape: f32[2,8,32], index: 1, kind: input, shape index: {}]
  %s2 = inlined_call_operand.hbm [shape: f32[4,32,32], index: 2, kind: input, shape index: {}]
  %s3 = inlined_call_operand.hbm [shape: f32[4,32,32], index: 3, kind: input, shape index: {}]
  %s4 = inlined_call_operand.hbm [shape: f32[4,32,32], index: 4, kind: input, shape index: {}]
  %s5 = inlined_call_operand.hbm [shape: f32[4,32,32], index: 5, kind: input, shape index: {}]
  %s6 = inlined_call_operand.hbm [shape: f32[2,8,32], index: 6, kind: output, shape index: {}]
  %s7 = sld [smem:[#allocation0]]
  $region101: #{tpu_custom_call.1} parent=0
    _
  %s9 = ssub.s32 1, %s7
  %s10 = scalar_select 0, %s9, %s7
  $region1: #{tpu_custom_call.1} parent=0
    #allocation7 [shape = 'u8[8192]{0}', space=vmem, size = 0x2000, scoped, tag = 'input window, operand 0']
    #allocation8 [shape = 's32[2]{0}', space=sflag, size = 0x8, scoped, tag = 'scoped memory for tpu_custom_call.1']
    #allocation9 [shape = 's32[2]{0}', space=sflag, size = 0x8, scoped, tag = 'scoped memory for tpu_custom_call.1']
    #allocation10 [shape = 'u8[8192]{0}', space=vmem, size = 0x2000, scoped, tag = 'input window, operand 1']
    #allocation11 [shape = 's32[2]{0}', space=sflag, size = 0x8, scoped, tag = 'scoped memory for tpu_custom_call.1']
    #allocation12 [shape = 'u8[32768]{0}', space=vmem, size = 0x8000, scoped, tag = 'input window, operand 2']
    #allocation13 [shape = 'u8[32768]{0}', space=vmem, size = 0x8000, scoped, tag = 'input window, operand 3']
    #allocation14 [shape = 's32[2]{0}', space=sflag, size = 0x8, scoped, tag = 'scoped memory for tpu_custom_call.1']
    #allocation15 [shape = 'u8[32768]{0}', space=vmem, size = 0x8000, scoped, tag = 'input window, operand 4']
    #allocation16 [shape = 'u8[32768]{0}', space=vmem, size = 0x8000, scoped, tag = 'input window, operand 5']
    #allocation17 [shape = 's32[2]{0}', space=sflag, size = 0x8, scoped, tag = 'scoped memory for tpu_custom_call.1']
    #allocation18 [shape = 'u8[8192]{0}', space=vmem, size = 0x2000, scoped, tag = 'output window, operand 0']
    %11 = vsyncpa [#allocation8], 0
    %s12 = scalar_lea.sflag [#allocation8], 1
    %13 = vsyncpa %s12, 0
    %14 = vsyncpa [#allocation11], 0
    %s15 = scalar_lea.sflag [#allocation11], 1
    %16 = vsyncpa %s15, 0
    %17 = vsyncpa [#allocation14], 0
    %s18 = scalar_lea.sflag [#allocation14], 1
    %19 = vsyncpa %s18, 0
    %20 = vsyncpa [#allocation17], 0
    %s21 = scalar_lea.sflag [#allocation17], 1
    %22 = vsyncpa %s21, 0
    %23 = vsyncpa [#allocation9], 0
    %s24 = scalar_lea.sflag [#allocation9], 1
    %25 = vsyncpa %s24, 0
    loop: start=0, step=1, limit=10
    $region2: #{tpu_custom_call.1} parent=1 // loop_pre_header
      _
    $region3: #{tpu_custom_call.1} parent=1 // loop_header
      %s27 = sphi 0, %s31
      %p28 = scmp.ge.s32.totalorder %s27, 10
      %s34 = sphi 0, %s60
      %s35 = sphi 0, %s56
      %s36 = sphi 0, %s52
      %s37 = sphi 0, %s48
      %s38 = sphi 0, %s34
      %s39 = sphi 0, %s35
      %s40 = sphi 0, %s36
      %s41 = sphi 0, %s37
      %s42 = sphi 0, %s38
      %s43 = sphi 0, %s39
      %s44 = sphi 0, %s40
      %s45 = sphi 0, %s41
      %s65 = sphi 0, %s67
      %s68 = sphi 0, %s65
      %s69 = sphi 0, %s68
      %s85 = sphi 0, %s69
      %s93 = sphi 0, %s95
      %s96 = sphi 0, %s93
      %s97 = sphi 0, %s96
      %s113 = sphi 0, %s97
      %s119 = sphi 0, %s121
      %s122 = sphi 0, %s119
      %s123 = sphi 0, %s122
      %s139 = sphi 0, %s123
      %s145 = sphi 0, %s147
      %s148 = sphi 0, %s145
      %s149 = sphi 0, %s148
      %s165 = sphi 0, %s149
      %s171 = sphi 0, %s173
      %s174 = sphi 0, %s171
      %s175 = sphi 0, %s174
      %s191 = sphi 0, %s175
      %s197 = sphi 0, %s199
      %s200 = sphi 0, %s197
      %s201 = sphi 0, %s200
      %s217 = sphi 0, %s201
      %s225 = sphi 0, %s227
      %s228 = sphi 0, %s225
      %s229 = sphi 0, %s228
      %s245 = sphi 0, %s229
    $region4: #{tpu_custom_call.1} parent=1 // loop_header_branch
      %30 = sbr.rel (%p28) target = $region8
    $region5: #{tpu_custom_call.1} parent=1 // loop_body
      %s32 = ssub.s32 %s27, 1
      %s33 = ssub.s32 %s27, 2
      %s46 = sadd.s32 1, %s37
      %p47 = scmp.ge.s32.totalorder %s46, 1
      %s48 = scalar_select %p47, 0, %s46
      %s49 = sadd.s32 1, %s36
      %s50 = scalar_select %p47, %s49, %s36
      %p51 = scmp.ge.s32.totalorder %s50, 4
      %s52 = scalar_select %p51, 0, %s50
      %s53 = sadd.s32 1, %s35
      %s54 = scalar_select %p51, %s53, %s35
      %p55 = scmp.ge.s32.totalorder %s54, 1
      %s56 = scalar_select %p55, 0, %s54
      %s57 = sadd.s32 1, %s34
      %s58 = scalar_select %p55, %s57, %s34
      %p59 = scmp.ge.s32.totalorder %s58, 2
      %s60 = scalar_select %p59, 0, %s58
      %s61 = ssub.s32 %s34, %s60
      %s62 = ssub.s32 %s35, %s56
      %s63 = sor.u32 %s61, %s62
      %p64 = scmp.eq.s32.totalorder %s63, 0
      %s66 = sadd.s32 %s65, 1
      %s67 = scalar_select %p64, %s65, %s66
      %p70 = pneg %p64
      %p71 = scmp.eq.s32.totalorder %s27, 7
      %p72 = por %p70, %p71
      %p73 = scmp.ne.s32.totalorder %s65, %s68
      %p74 = scmp.eq.s32.totalorder %s27, 0
      %p75 = por %p73, %p74
      %p76 = scmp.ne.s32.totalorder %s65, %s68
      %p77 = scmp.eq.s32.totalorder %s32, 7
      %p78 = por %p76, %p77
      %p79 = scmp.ne.s32.totalorder %s68, %s69
      %p80 = scmp.eq.s32.totalorder %s32, 0
      %p81 = por %p79, %p80
      %p82 = scmp.ne.s32.totalorder %s68, %s69
      %p83 = scmp.eq.s32.totalorder %s33, 7
      %p84 = por %p82, %p83
      %p86 = scmp.ne.s32.totalorder %s69, %s85
      %p87 = scmp.eq.s32.totalorder %s33, 0
      %p88 = por %p86, %p87
      %s89 = ssub.s32 %s34, %s60
      %s90 = ssub.s32 %s37, %s48
      %s91 = sor.u32 %s89, %s90
      %p92 = scmp.eq.s32.totalorder %s91, 0
      %s94 = sadd.s32 %s93, 1
      %s95 = scalar_select %p92, %s93, %s94
      %p98 = pneg %p92
      %p99 = scmp.eq.s32.totalorder %s27, 7
      %p100 = por %p98, %p99
      %p101 = scmp.ne.s32.totalorder %s93, %s96
      %p102 = scmp.eq.s32.totalorder %s27, 0
      %p103 = por %p101, %p102
      %p104 = scmp.ne.s32.totalorder %s93, %s96
      %p105 = scmp.eq.s32.totalorder %s32, 7
      %p106 = por %p104, %p105
      %p107 = scmp.ne.s32.totalorder %s96, %s97
      %p108 = scmp.eq.s32.totalorder %s32, 0
      %p109 = por %p107, %p108
      %p110 = scmp.ne.s32.totalorder %s96, %s97
      %p111 = scmp.eq.s32.totalorder %s33, 7
      %p112 = por %p110, %p111
      %p114 = scmp.ne.s32.totalorder %s97, %s113
      %p115 = scmp.eq.s32.totalorder %s33, 0
      %p116 = por %p114, %p115
      %s117 = ssub.s32 %s36, %s52
      %p118 = scmp.eq.s32.totalorder %s117, 0
      %s120 = sadd.s32 %s119, 1
      %s121 = scalar_select %p118, %s119, %s120
      %p124 = pneg %p118
      %p125 = scmp.eq.s32.totalorder %s27, 7
      %p126 = por %p124, %p125
      %p127 = scmp.ne.s32.totalorder %s119, %s122
      %p128 = scmp.eq.s32.totalorder %s27, 0
      %p129 = por %p127, %p128
      %p130 = scmp.ne.s32.totalorder %s119, %s122
      %p131 = scmp.eq.s32.totalorder %s32, 7
      %p132 = por %p130, %p131
      %p133 = scmp.ne.s32.totalorder %s122, %s123
      %p134 = scmp.eq.s32.totalorder %s32, 0
      %p135 = por %p133, %p134
      %p136 = scmp.ne.s32.totalorder %s122, %s123
      %p137 = scmp.eq.s32.totalorder %s33, 7
      %p138 = por %p136, %p137
      %p140 = scmp.ne.s32.totalorder %s123, %s139
      %p141 = scmp.eq.s32.totalorder %s33, 0
      %p142 = por %p140, %p141
      %s143 = ssub.s32 %s36, %s52
      %p144 = scmp.eq.s32.totalorder %s143, 0
      %s146 = sadd.s32 %s145, 1
      %s147 = scalar_select %p144, %s145, %s146
      %p150 = pneg %p144
      %p151 = scmp.eq.s32.totalorder %s27, 7
      %p152 = por %p150, %p151
      %p153 = scmp.ne.s32.totalorder %s145, %s148
      %p154 = scmp.eq.s32.totalorder %s27, 0
      %p155 = por %p153, %p154
      %p156 = scmp.ne.s32.totalorder %s145, %s148
      %p157 = scmp.eq.s32.totalorder %s32, 7
      %p158 = por %p156, %p157
      %p159 = scmp.ne.s32.totalorder %s148, %s149
      %p160 = scmp.eq.s32.totalorder %s32, 0
      %p161 = por %p159, %p160
      %p162 = scmp.ne.s32.totalorder %s148, %s149
      %p163 = scmp.eq.s32.totalorder %s33, 7
      %p164 = por %p162, %p163
      %p166 = scmp.ne.s32.totalorder %s149, %s165
      %p167 = scmp.eq.s32.totalorder %s33, 0
      %p168 = por %p166, %p167
      %s169 = ssub.s32 %s36, %s52
      %p170 = scmp.eq.s32.totalorder %s169, 0
      %s172 = sadd.s32 %s171, 1
      %s173 = scalar_select %p170, %s171, %s172
      %p176 = pneg %p170
      %p177 = scmp.eq.s32.totalorder %s27, 7
      %p178 = por %p176, %p177
      %p179 = scmp.ne.s32.totalorder %s171, %s174
      %p180 = scmp.eq.s32.totalorder %s27, 0
      %p181 = por %p179, %p180
      %p182 = scmp.ne.s32.totalorder %s171, %s174
      %p183 = scmp.eq.s32.totalorder %s32, 7
      %p184 = por %p182, %p183
      %p185 = scmp.ne.s32.totalorder %s174, %s175
      %p186 = scmp.eq.s32.totalorder %s32, 0
      %p187 = por %p185, %p186
      %p188 = scmp.ne.s32.totalorder %s174, %s175
      %p189 = scmp.eq.s32.totalorder %s33, 7
      %p190 = por %p188, %p189
      %p192 = scmp.ne.s32.totalorder %s175, %s191
      %p193 = scmp.eq.s32.totalorder %s33, 0
      %p194 = por %p192, %p193
      %s195 = ssub.s32 %s36, %s52
      %p196 = scmp.eq.s32.totalorder %s195, 0
      %s198 = sadd.s32 %s197, 1
      %s199 = scalar_select %p196, %s197, %s198
      %p202 = pneg %p196
      %p203 = scmp.eq.s32.totalorder %s27, 7
      %p204 = por %p202, %p203
      %p205 = scmp.ne.s32.totalorder %s197, %s200
      %p206 = scmp.eq.s32.totalorder %s27, 0
      %p207 = por %p205, %p206
      %p208 = scmp.ne.s32.totalorder %s197, %s200
      %p209 = scmp.eq.s32.totalorder %s32, 7
      %p210 = por %p208, %p209
      %p211 = scmp.ne.s32.totalorder %s200, %s201
      %p212 = scmp.eq.s32.totalorder %s32, 0
      %p213 = por %p211, %p212
      %p214 = scmp.ne.s32.totalorder %s200, %s201
      %p215 = scmp.eq.s32.totalorder %s33, 7
      %p216 = por %p214, %p215
      %p218 = scmp.ne.s32.totalorder %s201, %s217
      %p219 = scmp.eq.s32.totalorder %s33, 0
      %p220 = por %p218, %p219
      %s221 = ssub.s32 %s34, %s60
      %s222 = ssub.s32 %s35, %s56
      %s223 = sor.u32 %s221, %s222
      %p224 = scmp.eq.s32.totalorder %s223, 0
      %s226 = sadd.s32 %s225, 1
      %s227 = scalar_select %p224, %s225, %s226
      %p230 = pneg %p224
      %p231 = scmp.eq.s32.totalorder %s27, 7
      %p232 = por %p230, %p231
      %p233 = scmp.ne.s32.totalorder %s225, %s228
      %p234 = scmp.eq.s32.totalorder %s27, 0
      %p235 = por %p233, %p234
      %p236 = scmp.ne.s32.totalorder %s225, %s228
      %p237 = scmp.eq.s32.totalorder %s32, 7
      %p238 = por %p236, %p237
      %p239 = scmp.ne.s32.totalorder %s228, %s229
      %p240 = scmp.eq.s32.totalorder %s32, 0
      %p241 = por %p239, %p240
      %p242 = scmp.ne.s32.totalorder %s228, %s229
      %p243 = scmp.eq.s32.totalorder %s33, 7
      %p244 = por %p242, %p243
      %p246 = scmp.ne.s32.totalorder %s229, %s245
      %p247 = scmp.eq.s32.totalorder %s33, 0
      %p248 = por %p246, %p247
      %p249 = scmp.le.s32.totalorder 1, %s27
      %p250 = scmp.lt.s32.totalorder %s27, 9
      %p251 = pnand %p249, %p250
      %p252 = pneg %p251
      // Predicated region
      $region9: #{tpu_custom_call.1} parent=5 // pred_check
        _
      $region10: #{tpu_custom_call.1} parent=5 // pred_check_branch
        %254 = sbr.rel (%p251) target = $region12
      $region11: #{tpu_custom_call.1} parent=5 // pred_region
        %s255 = ssub.s32 %s27, 1
      $region12: #{tpu_custom_call.1} parent=5 // pred_fallthru
        _
      %p256 = scmp.lt.s32.totalorder %s27, 8
      // Predicated region
      $region13: #{tpu_custom_call.1} parent=5 // pred_check
        %p257 = pneg %p256
      $region14: #{tpu_custom_call.1} parent=5 // pred_check_branch
        %259 = sbr.rel (%p257) target = $region16
      $region15: #{tpu_custom_call.1} parent=5 // pred_region
        // Predicated region
        $region17: #{tpu_custom_call.1} parent=15 // pred_check
          %p260 = pneg %p75
        $region18: #{tpu_custom_call.1} parent=15 // pred_check_branch
          %262 = sbr.rel (%p260) target = $region20
        $region19: #{tpu_custom_call.1} parent=15 // pred_region
          %s263 = sand.u32 %s65, 1
          %s264 = scalar_lea.sflag [#allocation8], %s263
          %s265 = sand.u32 %s65, 1
          %s266 = smul.addr %s265, 8
          %s267 = scalar_lea.vmem [#allocation7], %s266
          %269 = vsyncadd %s264, 0
          %s270 = sadd.s32 %s35, %s34
          %s271 = smul.addr %s270, 8
          %s272 = scalar_lea.hbm %s0, %s271
          %s274 = sshll.u32 %s272, 4
          %s275 = int_to_ptr.hbm [resolvable:$true] %s274
          %s276 = sshll.u32 %s267, 4
          %s277 = int_to_ptr.vmem [resolvable:$true] %s276
          %279 = dma.hbm_to_vmem [thread:$0]  %s275, 128, %s277, %s264
        $region20: #{tpu_custom_call.1} parent=15 // pred_fallthru
          _
        // Predicated region
        $region21: #{tpu_custom_call.1} parent=15 // pred_check
          %p280 = pneg %p103
        $region22: #{tpu_custom_call.1} parent=15 // pred_check_branch
          %282 = sbr.rel (%p280) target = $region24
        $region23: #{tpu_custom_call.1} parent=15 // pred_region
          %s283 = sand.u32 %s27, 1
          %s284 = scalar_lea.sflag [#allocation11], %s283
          %s285 = sand.u32 %s93, 1
          %s286 = smul.addr %s285, 8
          %s287 = scalar_lea.vmem [#allocation10], %s286
          %289 = vsyncadd %s284, 0
          %s290 = sadd.s32 %s37, %s34
          %s291 = smul.addr %s290, 8
          %s292 = scalar_lea.hbm %s1, %s291
          %s294 = sshll.u32 %s292, 4
          %s295 = int_to_ptr.hbm [resolvable:$true] %s294
          %s296 = sshll.u32 %s287, 4
          %s297 = int_to_ptr.vmem [resolvable:$true] %s296
          %299 = dma.hbm_to_vmem [thread:$0]  %s295, 128, %s297, %s284
        $region24: #{tpu_custom_call.1} parent=15 // pred_fallthru
          _
        // Predicated region
        $region25: #{tpu_custom_call.1} parent=15 // pred_check
          %p300 = pneg %p129
        $region26: #{tpu_custom_call.1} parent=15 // pred_check_branch
          %302 = sbr.rel (%p300) target = $region28
        $region27: #{tpu_custom_call.1} parent=15 // pred_region
          %s303 = sand.u32 %s27, 1
          %s304 = scalar_lea.sflag [#allocation11], %s303
          %s305 = sand.u32 %s119, 1
          %s306 = smul.addr %s305, 32
          %s307 = scalar_lea.vmem [#allocation12], %s306
          %309 = vsyncadd %s304, 0
          %s310 = smul.addr %s36, 4
          %s311 = smul.addr %s310, 8
          %s312 = scalar_lea.hbm %s2, %s311
          %s313 = sshll.u32 %s312, 4
          %s314 = int_to_ptr.hbm [resolvable:$true] %s313
          %s315 = sshll.u32 %s307, 4
          %s316 = int_to_ptr.vmem [resolvable:$true] %s315
          %321 = dma.hbm_to_vmem [thread:$0]  %s314, 512, %s316, %s304, 128, 128, 8
        $region28: #{tpu_custom_call.1} parent=15 // pred_fallthru
          _
        // Predicated region
        $region29: #{tpu_custom_call.1} parent=15 // pred_check
          %p322 = pneg %p155
        $region30: #{tpu_custom_call.1} parent=15 // pred_check_branch
          %324 = sbr.rel (%p322) target = $region32
        $region31: #{tpu_custom_call.1} parent=15 // pred_region
          %s325 = sand.u32 %s27, 1
          %s326 = scalar_lea.sflag [#allocation14], %s325
          %s327 = sand.u32 %s145, 1
          %s328 = smul.addr %s327, 32
          %s329 = scalar_lea.vmem [#allocation13], %s328
          %331 = vsyncadd %s326, 0
          %s332 = smul.addr %s36, 4
          %s333 = smul.addr %s332, 8
          %s334 = scalar_lea.hbm %s3, %s333
          %s335 = sshll.u32 %s334, 4
          %s336 = int_to_ptr.hbm [resolvable:$true] %s335
          %s337 = sshll.u32 %s329, 4
          %s338 = int_to_ptr.vmem [resolvable:$true] %s337
          %343 = dma.hbm_to_vmem [thread:$0]  %s336, 512, %s338, %s326, 128, 128, 8
        $region32: #{tpu_custom_call.1} parent=15 // pred_fallthru
          _
        // Predicated region
        $region33: #{tpu_custom_call.1} parent=15 // pred_check
          %p344 = pneg %p181
        $region34: #{tpu_custom_call.1} parent=15 // pred_check_branch
          %346 = sbr.rel (%p344) target = $region36
        $region35: #{tpu_custom_call.1} parent=15 // pred_region
          %s347 = sand.u32 %s27, 1
          %s348 = scalar_lea.sflag [#allocation14], %s347
          %s349 = sand.u32 %s171, 1
          %s350 = smul.addr %s349, 32
          %s351 = scalar_lea.vmem [#allocation15], %s350
          %353 = vsyncadd %s348, 0
          %s354 = smul.addr %s36, 4
          %s355 = smul.addr %s354, 8
          %s356 = scalar_lea.hbm %s4, %s355
          %s357 = sshll.u32 %s356, 4
          %s358 = int_to_ptr.hbm [resolvable:$true] %s357
          %s359 = sshll.u32 %s351, 4
          %s360 = int_to_ptr.vmem [resolvable:$true] %s359
          %365 = dma.hbm_to_vmem [thread:$0]  %s358, 512, %s360, %s348, 128, 128, 8
        $region36: #{tpu_custom_call.1} parent=15 // pred_fallthru
          _
        // Predicated region
        $region37: #{tpu_custom_call.1} parent=15 // pred_check
          %p366 = pneg %p207
        $region38: #{tpu_custom_call.1} parent=15 // pred_check_branch
          %368 = sbr.rel (%p366) target = $region40
        $region39: #{tpu_custom_call.1} parent=15 // pred_region
          %s369 = sand.u32 %s197, 1
          %s370 = scalar_lea.sflag [#allocation17], %s369
          %s371 = sand.u32 %s197, 1
          %s372 = smul.addr %s371, 32
          %s373 = scalar_lea.vmem [#allocation16], %s372
          %375 = vsyncadd %s370, 0
          %s376 = smul.addr %s36, 4
          %s377 = smul.addr %s376, 8
          %s378 = scalar_lea.hbm %s5, %s377
          %s379 = sshll.u32 %s378, 4
          %s380 = int_to_ptr.hbm [resolvable:$true] %s379
          %s381 = sshll.u32 %s373, 4
          %s382 = int_to_ptr.vmem [resolvable:$true] %s381
          %387 = dma.hbm_to_vmem [thread:$0]  %s380, 512, %s382, %s370, 128, 128, 8
        $region40: #{tpu_custom_call.1} parent=15 // pred_fallthru
          _
      $region16: #{tpu_custom_call.1} parent=5 // pred_fallthru
        _
      %p388 = scmp.le.s32.totalorder 1, %s27
      %p389 = scmp.lt.s32.totalorder %s27, 9
      %p390 = pnand %p388, %p389
      %p391 = pneg %p390
      // Predicated region
      $region41: #{tpu_custom_call.1} parent=5 // pred_check
        _
      $region42: #{tpu_custom_call.1} parent=5 // pred_check_branch
        %393 = sbr.rel (%p390) target = $region44
      $region43: #{tpu_custom_call.1} parent=5 // pred_region
        %s394 = ssub.s32 %s27, 1
        %s395 = sand.u32 %s68, 1
        %s396 = scalar_lea.sflag [#allocation8], %s395
        %s397 = sand.u32 %s68, 1
        %s398 = smul.addr %s397, 8
        %s399 = scalar_lea.vmem [#allocation7], %s398
        // Predicated region
        $region45: #{tpu_custom_call.1} parent=43 // pred_check
          %p400 = pneg %p81
        $region46: #{tpu_custom_call.1} parent=43 // pred_check_branch
          %402 = sbr.rel (%p400) target = $region48
        $region47: #{tpu_custom_call.1} parent=43 // pred_region
          %404 = dma.done %s396, 128
        $region48: #{tpu_custom_call.1} parent=43 // pred_fallthru
          _
        %s405 = sand.u32 %s32, 1
        %s406 = scalar_lea.sflag [#allocation11], %s405
        %s407 = sand.u32 %s96, 1
        %s408 = smul.addr %s407, 8
        %s409 = scalar_lea.vmem [#allocation10], %s408
        // Predicated region
        $region49: #{tpu_custom_call.1} parent=43 // pred_check
          %p410 = pneg %p109
        $region50: #{tpu_custom_call.1} parent=43 // pred_check_branch
          %412 = sbr.rel (%p410) target = $region52
        $region51: #{tpu_custom_call.1} parent=43 // pred_region
          %414 = dma.done %s406, 128
        $region52: #{tpu_custom_call.1} parent=43 // pred_fallthru
          _
        %s415 = sand.u32 %s32, 1
        %s416 = scalar_lea.sflag [#allocation11], %s415
        %s417 = sand.u32 %s122, 1
        %s418 = smul.addr %s417, 32
        %s419 = scalar_lea.vmem [#allocation12], %s418
        // Predicated region
        $region53: #{tpu_custom_call.1} parent=43 // pred_check
          %p420 = pneg %p135
        $region54: #{tpu_custom_call.1} parent=43 // pred_check_branch
          %422 = sbr.rel (%p420) target = $region56
        $region55: #{tpu_custom_call.1} parent=43 // pred_region
          %424 = dma.done %s416, 512
        $region56: #{tpu_custom_call.1} parent=43 // pred_fallthru
          _
        %s425 = sand.u32 %s32, 1
        %s426 = scalar_lea.sflag [#allocation14], %s425
        %s427 = sand.u32 %s148, 1
        %s428 = smul.addr %s427, 32
        %s429 = scalar_lea.vmem [#allocation13], %s428
        // Predicated region
        $region57: #{tpu_custom_call.1} parent=43 // pred_check
          %p430 = pneg %p161
        $region58: #{tpu_custom_call.1} parent=43 // pred_check_branch
          %432 = sbr.rel (%p430) target = $region60
        $region59: #{tpu_custom_call.1} parent=43 // pred_region
          %434 = dma.done %s426, 512
        $region60: #{tpu_custom_call.1} parent=43 // pred_fallthru
          _
        %s435 = sand.u32 %s32, 1
        %s436 = scalar_lea.sflag [#allocation14], %s435
        %s437 = sand.u32 %s174, 1
        %s438 = smul.addr %s437, 32
        %s439 = scalar_lea.vmem [#allocation15], %s438
        // Predicated region
        $region61: #{tpu_custom_call.1} parent=43 // pred_check
          %p440 = pneg %p187
        $region62: #{tpu_custom_call.1} parent=43 // pred_check_branch
          %442 = sbr.rel (%p440) target = $region64
        $region63: #{tpu_custom_call.1} parent=43 // pred_region
          %444 = dma.done %s436, 512
        $region64: #{tpu_custom_call.1} parent=43 // pred_fallthru
          _
        %s445 = sand.u32 %s200, 1
        %s446 = scalar_lea.sflag [#allocation17], %s445
        %s447 = sand.u32 %s200, 1
        %s448 = smul.addr %s447, 32
        %s449 = scalar_lea.vmem [#allocation16], %s448
        // Predicated region
        $region65: #{tpu_custom_call.1} parent=43 // pred_check
          %p450 = pneg %p213
        $region66: #{tpu_custom_call.1} parent=43 // pred_check_branch
          %452 = sbr.rel (%p450) target = $region68
        $region67: #{tpu_custom_call.1} parent=43 // pred_region
          %454 = dma.done %s446, 512
        $region68: #{tpu_custom_call.1} parent=43 // pred_fallthru
          _
        %s455 = sand.u32 %s68, 1
        %s456 = scalar_lea.sflag [#allocation8], %s455
        %s457 = sand.u32 %s68, 1
        %s458 = smul.addr %s457, 8
        %s459 = scalar_lea.vmem [#allocation7], %s458
        %p460 = pneg %p81
        %p461 = pneg %p78
        %s462 = sand.u32 %s32, 1
        %s463 = scalar_lea.sflag [#allocation11], %s462
        %s464 = sand.u32 %s96, 1
        %s465 = smul.addr %s464, 8
        %s466 = scalar_lea.vmem [#allocation10], %s465
        %p467 = pneg %p109
        %p468 = pneg %p106
        %s469 = sand.u32 %s32, 1
        %s470 = scalar_lea.sflag [#allocation11], %s469
        %s471 = sand.u32 %s122, 1
        %s472 = smul.addr %s471, 32
        %s473 = scalar_lea.vmem [#allocation12], %s472
        %p474 = pneg %p135
        %p475 = pneg %p132
        %s476 = sand.u32 %s32, 1
        %s477 = scalar_lea.sflag [#allocation14], %s476
        %s478 = sand.u32 %s148, 1
        %s479 = smul.addr %s478, 32
        %s480 = scalar_lea.vmem [#allocation13], %s479
        %p481 = pneg %p161
        %p482 = pneg %p158
        %s483 = sand.u32 %s32, 1
        %s484 = scalar_lea.sflag [#allocation14], %s483
        %s485 = sand.u32 %s174, 1
        %s486 = smul.addr %s485, 32
        %s487 = scalar_lea.vmem [#allocation15], %s486
        %p488 = pneg %p187
        %p489 = pneg %p184
        %s490 = sand.u32 %s200, 1
        %s491 = scalar_lea.sflag [#allocation17], %s490
        %s492 = sand.u32 %s200, 1
        %s493 = smul.addr %s492, 32
        %s494 = scalar_lea.vmem [#allocation16], %s493
        %p495 = pneg %p213
        %p496 = pneg %p210
        %p497 = pneg %p241
        %p498 = pneg %p238
        %s499 = sand.u32 %s228, 1
        %s500 = scalar_lea.sflag [#allocation9], %s499
        %s501 = sand.u32 %s228, 1
        %s502 = smul.addr %s501, 8
        %s503 = scalar_lea.vmem [#allocation18], %s502
        %p504 = scmp.eq.s32.totalorder %s40, 0
        %p505 = scmp.eq.s32.totalorder %s41, 0
        %p506 = pnand %p504, %p505
        %p507 = pneg %p506
        // Predicated region
        $region69: #{tpu_custom_call.1} parent=43 // pred_check
          _
        $region70: #{tpu_custom_call.1} parent=43 // pred_check_branch
          %509 = sbr.rel (%p506) target = $region72
        $region71: #{tpu_custom_call.1} parent=43 // pred_region
          %vm510 = vcmask 261120
          %511 = vst.msk [vmem:[#allocation6] sm:$0xff] %vm510, 0.0
        $region72: #{tpu_custom_call.1} parent=43 // pred_fallthru
          _
        // Predicated region
        $region73: #{tpu_custom_call.1} parent=43 // pred_check
          %p512 = pneg %p505
        $region74: #{tpu_custom_call.1} parent=43 // pred_check_branch
          %514 = sbr.rel (%p512) target = $region76
        $region75: #{tpu_custom_call.1} parent=43 // pred_region
          %v515 = vld [vmem:[%s399] sm:$0xff]
          %v516 = vld [vmem:[%s419] sm:$0xff]
          %v517 = vld [vmem:[%s419 + $0x8] sm:$0xff]
          %v518 = vld [vmem:[%s419 + $0x10] sm:$0xff]
          %v519 = vld [vmem:[%s419 + $0x18] sm:$0xff]
          %vm520 = vcmask 261120
          %v522 = vsel %vm520, %v515, 0
          %524 = vmatpush.msra.mxu0 0.0
          %525 = vmatpush.msra.mxu0 0.0
          %526 = vmatpush.msra.mxu0 0.0
          %527 = vmatpush.msra.mxu0 0.0
          %528 = vmatpush.msra.mxu0 0.0
          %529 = vmatpush.msra.mxu0 0.0
          %530 = vmatpush.msra.mxu0 0.0
          %531 = vmatpush.msra.mxu0 0.0
          %532 = vmatpush.msra.mxu0 0.0
          %533 = vmatpush.msra.mxu0 0.0
          %534 = vmatpush.msra.mxu0 0.0
          %535 = vmatpush.msra.mxu0 0.0
          %536 = vmatpush.msra.mxu0 %v519
          %537 = vmatpush.msra.mxu0 %v518
          %538 = vmatpush.msra.mxu0 %v517
          %539 = vmatpush.msra.mxu0 %v516
          %540 = vmatmul.f32.gmra.mxu0 %v522
          %v541 = vpop.f32.mrf.mxu0
          %v542 = vadd.f32 0.0, %v541
          %543 = vdwg.mxu0
          %544 = vst.msk [vmem:[#allocation2] sm:$0xff] %vm520, %v542
          %vm545 = vcmask 7168
          %546 = vst.msk [vmem:[#allocation3] sm:$0xff] %vm545, -1e+30
          %547 = vst.msk [vmem:[#allocation4] sm:$0xff] %vm545, 0.0
          %548 = vst.msk [vmem:[#allocation5] sm:$0xff] %vm520, 0.0
        $region76: #{tpu_custom_call.1} parent=43 // pred_fallthru
          _
        %s549 = smul.u32 %s41, 8
        %s550 = smul.u32 %s39, 8
        %s551 = sadd.s32 %s550, 7
        %p552 = scmp.le.s32.totalorder %s549, %s551
        // Predicated region
        $region77: #{tpu_custom_call.1} parent=43 // pred_check
          %p553 = pneg %p552
        $region78: #{tpu_custom_call.1} parent=43 // pred_check_branch
          %555 = sbr.rel (%p553) target = $region80
        $region79: #{tpu_custom_call.1} parent=43 // pred_region
          %v556 = vld [vmem:[%s409] sm:$0xff]
          %v557 = vld [vmem:[%s429] sm:$0xff]
          %v558 = vld [vmem:[%s429 + $0x8] sm:$0xff]
          %v559 = vld [vmem:[%s429 + $0x10] sm:$0xff]
          %v560 = vld [vmem:[%s429 + $0x18] sm:$0xff]
          %vm561 = vcmask 261120
          %v563 = vsel %vm561, %v556, 0
          %565 = vmatpush.msra.mxu0 0.0
          %566 = vmatpush.msra.mxu0 0.0
          %567 = vmatpush.msra.mxu0 0.0
          %568 = vmatpush.msra.mxu0 0.0
          %569 = vmatpush.msra.mxu0 0.0
          %570 = vmatpush.msra.mxu0 0.0
          %571 = vmatpush.msra.mxu0 0.0
          %572 = vmatpush.msra.mxu0 0.0
          %573 = vmatpush.msra.mxu0 0.0
          %574 = vmatpush.msra.mxu0 0.0
          %575 = vmatpush.msra.mxu0 0.0
          %576 = vmatpush.msra.mxu0 0.0
          %577 = vmatpush.msra.mxu0 %v560
          %578 = vmatpush.msra.mxu0 %v559
          %579 = vmatpush.msra.mxu0 %v558
          %580 = vmatpush.msra.mxu0 %v557
          %581 = vmatmul.f32.gmra.mxu0 %v563
          %v582 = vpop.f32.mrf.mxu0
          %v583 = vadd.f32 0.0, %v582
          %584 = vdwg.mxu0
          %v585 = vld [vmem:[%s439] sm:$0xff]
          %v586 = vld [vmem:[%s439 + $0x8] sm:$0xff]
          %v587 = vld [vmem:[%s439 + $0x10] sm:$0xff]
          %v588 = vld [vmem:[%s439 + $0x18] sm:$0xff]
          %589 = vmatpush.msra.mxu0 0.0
          %590 = vmatpush.msra.mxu0 0.0
          %591 = vmatpush.msra.mxu0 0.0
          %592 = vmatpush.msra.mxu0 0.0
          %593 = vmatpush.msra.mxu0 0.0
          %594 = vmatpush.msra.mxu0 0.0
          %595 = vmatpush.msra.mxu0 0.0
          %596 = vmatpush.msra.mxu0 0.0
          %597 = vmatpush.msra.mxu0 0.0
          %598 = vmatpush.msra.mxu0 0.0
          %599 = vmatpush.msra.mxu0 0.0
          %600 = vmatpush.msra.mxu0 0.0
          %601 = vmatpush.msra.mxu0 %v588
          %602 = vmatpush.msra.mxu0 %v587
          %603 = vmatpush.msra.mxu0 %v586
          %604 = vmatpush.msra.mxu0 %v585
          %605 = vmatmul.f32.gmra.mxu0 %v563
          %v606 = vpop.f32.mrf.mxu0
          %v607 = vadd.f32 0.0, %v606
          %608 = vdwg.mxu0
          %v609 = vld [vmem:[#allocation2] sm:$0xff]
          %v611 = vsel %vm561, %v609, 0
          %v614 = vsel %vm561, %v583, 0
          %616 = vmatpush.xpose.msra.mxu0 0.0
          %617 = vmatpush.xpose.msra.mxu0 0.0
          %618 = vmatpush.xpose.msra.mxu0 0.0
          %619 = vmatpush.xpose.msra.mxu0 0.0
          %620 = vmatpush.xpose.msra.mxu0 0.0
          %621 = vmatpush.xpose.msra.mxu0 0.0
          %622 = vmatpush.xpose.msra.mxu0 0.0
          %623 = vmatpush.xpose.msra.mxu0 0.0
          %624 = vmatpush.xpose.msra.mxu0 0.0
          %625 = vmatpush.xpose.msra.mxu0 0.0
          %626 = vmatpush.xpose.msra.mxu0 0.0
          %627 = vmatpush.xpose.msra.mxu0 0.0
          %628 = vmatpush.xpose.msra.mxu0 0.0
          %629 = vmatpush.xpose.msra.mxu0 0.0
          %630 = vmatpush.xpose.msra.mxu0 0.0
          %631 = vmatpush.xpose.msra.mxu0 %v614
          %632 = vmatmul.f32.gmra.mxu0 %v611
          %v633 = vpop.f32.mrf.mxu0
          %v634 = vadd.f32 0.0, %v633
          %635 = vdwg.mxu0
          %v636 = vlaneseq
          %v637 = vshrl.u32 %v636, 7
          %v638 = vstv %s550
          %v639 = vadd.s32 %v638, %v637
          %v640 = vlaneseq
          %v641 = vand.u32 %v640, 127
          %v642 = vstv %s549
          %v643 = vadd.s32 %v642, %v641
          %vm644 = vcmp.le.s32.totalorder %v643, %v639
          %v645 = vsel %vm644, %v634, -1e+30
          %v646 = vld [vmem:[#allocation3] sm:$0xff]
          %vm647 = vcmask 64512
          %v648 = vsel %vm647, %v645, -inf
          %649 = vmax.xlane.f32.xlu0 %v648
          %v650 = vpop.xlane.xlu0 %649
          %v651 = vmax.f32 %v646, %v650
          %v652 = vsub.f32 %v646, %v651
          %v653 = vmul.f32 %v652, 1.442695
          %v654 = vpow.pop %v653
          %656 = vset.pattern.permute.xlu0 0
          %657 = vperm.xlu0 %656, %v651
          %v658 = vpop.permute.xlu0 %657
          %v660 = vsub.f32 %v645, %v658
          %v661 = vmul.f32 %v660, 1.442695
          %v662 = vpow.pop %v661
          %v663 = vld [vmem:[#allocation4] sm:$0xff]
          %v664 = vmul.f32 %v654, %v663
          %v665 = vsel %vm647, %v662, 0.0
          %666 = vadd.xlane.f32.xlu0 %v665
          %v667 = vpop.xlane.xlu0 %666
          %v668 = vadd.f32 %v664, %v667
          %vm669 = vcmask 7168
          %670 = vst.msk [vmem:[#allocation4] sm:$0xff] %vm669, %v668
          %v671 = vld [vmem:[#allocation5] sm:$0xff]
          %673 = vset.pattern.permute.xlu0 0
          %674 = vperm.xlu0 %673, %v654
          %v675 = vpop.permute.xlu0 %674
          %v677 = vmul.f32 %v675, %v671
          %v679 = vsel %vm647, %v662, 0
          %681 = vmatpush.msra.mxu0 0.0
          %682 = vmatpush.msra.mxu0 0.0
          %683 = vmatpush.msra.mxu0 0.0
          %684 = vmatpush.msra.mxu0 0.0
          %685 = vmatpush.msra.mxu0 0.0
          %686 = vmatpush.msra.mxu0 0.0
          %687 = vmatpush.msra.mxu0 0.0
          %688 = vmatpush.msra.mxu0 0.0
          %689 = vmatpush.msra.mxu0 0.0
          %690 = vmatpush.msra.mxu0 0.0
          %691 = vmatpush.msra.mxu0 0.0
          %692 = vmatpush.msra.mxu0 0.0
          %693 = vmatpush.msra.mxu0 0.0
          %694 = vmatpush.msra.mxu0 0.0
          %695 = vmatpush.msra.mxu0 0.0
          %696 = vmatpush.msra.mxu0 %v607
          %697 = vmatmul.f32.gmra.mxu0 %v679
          %v698 = vpop.f32.mrf.mxu0
          %v699 = vadd.f32 0.0, %v698
          %700 = vdwg.mxu0
          %v701 = vadd.f32 %v677, %v699
          %702 = vst.msk [vmem:[#allocation5] sm:$0xff] %vm561, %v701
          %703 = vst.msk [vmem:[#allocation3] sm:$0xff] %vm669, %v651
        $region80: #{tpu_custom_call.1} parent=43 // pred_fallthru
          _
        // Predicated region
        $region81: #{tpu_custom_call.1} parent=43 // pred_check
          %p704 = pneg %p505
        $region82: #{tpu_custom_call.1} parent=43 // pred_check_branch
          %706 = sbr.rel (%p704) target = $region84
        $region83: #{tpu_custom_call.1} parent=43 // pred_region
          %v707 = vld [vmem:[#allocation5] sm:$0xff]
          %v708 = vld [vmem:[#allocation4] sm:$0xff]
          %v709 = vrcp.pop %v708
          %v710 = vmul.f32 %v708, %v709
          %v711 = vsub.f32 1.0, %v710
          %v712 = vmul.f32 %v709, %v711
          %v713 = vadd.f32 %v709, %v712
          %vm714 = vweird.f32 %v708
          %vm715 = vweird.f32 %v709
          %vm716 = vmor %vm714, %vm715
          %v717 = vsel %vm716, %v709, %v713
          %v718 = vand.u32 2147483647, %v708
          %vm719 = vcmp.eq.f32.partialorder %v718, 8.507059e+37
          %v720 = vand.u32 %v708, 2147483648
          %v721 = vor.u32 1.1754944e-38, %v720
          %v722 = vsel %vm719, %v721, %v717
          %724 = vset.pattern.permute.xlu0 0
          %725 = vperm.xlu0 %724, %v722
          %v726 = vpop.permute.xlu0 %725
          %v728 = vmul.f32 %v707, %v726
          %v729 = vld [vmem:[#allocation6] sm:$0xff]
          %v730 = vld [vmem:[%s449] sm:$0xff]
          %v731 = vld [vmem:[%s449 + $0x8] sm:$0xff]
          %v732 = vld [vmem:[%s449 + $0x10] sm:$0xff]
          %v733 = vld [vmem:[%s449 + $0x18] sm:$0xff]
          %vm734 = vcmask 261120
          %v736 = vsel %vm734, %v728, 0
          %738 = vmatpush.msra.mxu0 0.0
          %739 = vmatpush.msra.mxu0 0.0
          %740 = vmatpush.msra.mxu0 0.0
          %741 = vmatpush.msra.mxu0 0.0
          %742 = vmatpush.msra.mxu0 0.0
          %743 = vmatpush.msra.mxu0 0.0
          %744 = vmatpush.msra.mxu0 0.0
          %745 = vmatpush.msra.mxu0 0.0
          %746 = vmatpush.msra.mxu0 0.0
          %747 = vmatpush.msra.mxu0 0.0
          %748 = vmatpush.msra.mxu0 0.0
          %749 = vmatpush.msra.mxu0 0.0
          %750 = vmatpush.msra.mxu0 %v733
          %751 = vmatpush.msra.mxu0 %v732
          %752 = vmatpush.msra.mxu0 %v731
          %753 = vmatpush.msra.mxu0 %v730
          %754 = vmatmul.f32.gmra.mxu0 %v736
          %v755 = vpop.f32.mrf.mxu0
          %v756 = vadd.f32 0.0, %v755
          %757 = vdwg.mxu0
          %v758 = vadd.f32 %v729, %v756
          %759 = vst.msk [vmem:[#allocation6] sm:$0xff] %vm734, %v758
        $region84: #{tpu_custom_call.1} parent=43 // pred_fallthru
          _
        %p760 = scmp.eq.s32.totalorder %s40, 3
        %p761 = pnand %p760, %p505
        %p762 = pneg %p761
        // Predicated region
        $region85: #{tpu_custom_call.1} parent=43 // pred_check
          _
        $region86: #{tpu_custom_call.1} parent=43 // pred_check_branch
          %764 = sbr.rel (%p761) target = $region88
        $region87: #{tpu_custom_call.1} parent=43 // pred_region
          %v765 = vld [vmem:[#allocation6] sm:$0xff]
          %vm766 = vcmask 261120
          %767 = vst.msk [vmem:[%s503] sm:$0xff] %vm766, %v765
        $region88: #{tpu_custom_call.1} parent=43 // pred_fallthru
          _
        %s768 = sand.u32 %s228, 1
        %s769 = scalar_lea.sflag [#allocation9], %s768
        %s770 = sand.u32 %s228, 1
        %s771 = smul.addr %s770, 8
        %s772 = scalar_lea.vmem [#allocation18], %s771
        // Predicated region
        $region89: #{tpu_custom_call.1} parent=43 // pred_check
          %p773 = pneg %p238
        $region90: #{tpu_custom_call.1} parent=43 // pred_check_branch
          %775 = sbr.rel (%p773) target = $region92
        $region91: #{tpu_custom_call.1} parent=43 // pred_region
          %777 = vsyncadd %s769, 0
          %s778 = sadd.s32 %s39, %s38
          %s779 = smul.addr %s778, 8
          %s780 = scalar_lea.hbm %s6, %s779
          %s782 = sshll.u32 %s772, 4
          %s783 = int_to_ptr.vmem [resolvable:$true] %s782
          %s784 = sshll.u32 %s780, 4
          %s785 = int_to_ptr.hbm [resolvable:$true] %s784
          %787 = dma.vmem_to_hbm [thread:$0]  %s783, 128, %s785, %s769
        $region92: #{tpu_custom_call.1} parent=43 // pred_fallthru
          _
      $region44: #{tpu_custom_call.1} parent=5 // pred_fallthru
        _
      %p788 = scmp.le.s32.totalorder 2, %s27
      // Predicated region
      $region93: #{tpu_custom_call.1} parent=5 // pred_check
        %p789 = pneg %p788
      $region94: #{tpu_custom_call.1} parent=5 // pred_check_branch
        %791 = sbr.rel (%p789) target = $region96
      $region95: #{tpu_custom_call.1} parent=5 // pred_region
        %s792 = ssub.s32 %s27, 2
        // Predicated region
        $region97: #{tpu_custom_call.1} parent=95 // pred_check
          %p793 = pneg %p244
        $region98: #{tpu_custom_call.1} parent=95 // pred_check_branch
          %795 = sbr.rel (%p793) target = $region100
        $region99: #{tpu_custom_call.1} parent=95 // pred_region
          %s796 = sand.u32 %s229, 1
          %s797 = scalar_lea.sflag [#allocation9], %s796
          %s798 = sand.u32 %s229, 1
          %s799 = smul.addr %s798, 8
          %s800 = scalar_lea.vmem [#allocation18], %s799
          %802 = dma.done %s797, 128
        $region100: #{tpu_custom_call.1} parent=95 // pred_fallthru
          _
      $region96: #{tpu_custom_call.1} parent=5 // pred_fallthru
        _
    $region6: #{tpu_custom_call.1} parent=1 // loop_footer
      %s31 = sadd.s32 1, %s27
    $region7: #{tpu_custom_call.1} parent=1 // loop_footer_branch
      %26 = sbr.rel target = $region3
    $region8: #{tpu_custom_call.1} parent=1 // loop_exit
      _
    %803 = vsyncpa [#allocation8], 1
    %s804 = scalar_lea.sflag [#allocation8], 1
    %805 = vsyncpa %s804, 1
    %806 = vsyncpa [#allocation11], 1
    %s807 = scalar_lea.sflag [#allocation11], 1
    %808 = vsyncpa %s807, 1
    %809 = vsyncpa [#allocation14], 1
    %s810 = scalar_lea.sflag [#allocation14], 1
    %811 = vsyncpa %s810, 1
    %812 = vsyncpa [#allocation17], 1
    %s813 = scalar_lea.sflag [#allocation17], 1
    %814 = vsyncpa %s813, 1
    %815 = vsyncpa [#allocation9], 1
    %s816 = scalar_lea.sflag [#allocation9], 1
    %817 = vsyncpa %s816, 1

</llo_original>
